<compile_context>
chip_gen: v6e
topology: v6e:2x2x1
jax: 0.10.0
libtpu: 0.0.40
codegen_flags: <defaults>
</compile_context>

<pallas_src>
import functools

import jax
import jax.numpy as jnp
from jax import lax
from jax.experimental import pallas as pl
from jax.experimental.pallas import tpu as pltpu


def _round_up(x, m):
    return ((x + m - 1) // m) * m


def _choose_tile_m(m):
    """M (patch-axis) tile: multiple of 16 (bf16 sublane packing), MXU-friendly size,
    preferring >= 4 grid steps (keeps both v7x TCs fed and DMA/compute overlapped),
    capped at 1024 rows so the working set stays comfortable in v7x's 64 MiB VMEM."""
    m_aligned = _round_up(m, 16)
    for tm in (1024, 512, 256, 128):
        if tm <= m_aligned and m_aligned // tm >= 4:
            return tm
    return min(m_aligned, 256)


def _patch_embed_kernel(x_ref, w_ref, b_ref, o_ref):
    # x_ref: [tm, K_pad]          (compute dtype, double-buffered over the M grid)
    # w_ref: [K_pad, hidden_pad]  (compute dtype, VMEM-resident: constant index_map)
    # b_ref: [1, hidden_pad]      (f32)
    # o_ref: [tm, hidden_pad]     (out dtype, lane-dense stores)
    acc = jnp.dot(x_ref[...], w_ref[...], preferred_element_type=jnp.float32)
    o_ref[...] = (acc + b_ref[...]).astype(o_ref.dtype)


def patch_embedding_forward(pixel_values, weight, bias, *, patch_size,
                            compute_dtype=jnp.bfloat16, out_dtype=jnp.bfloat16):
    """pixel_values: [B, C, H, W] (NCHW); weight: [hidden, C, P, P]; bias: [hidden].

    Returns [B, num_patches, hidden] in `out_dtype` (bf16 by default: downstream ViT
    blocks run in bf16, and a forced float output also protects integer image inputs).
    Note: bf16 compute changes numerics vs an f32 Conv2d (document for f32 comparisons)."""
    B, C, H, W = pixel_values.shape
    hidden = weight.shape[0]
    P = patch_size
    nh, nw = H // P, W // P
    M = B * nh * nw
    K = C * P * P

    # Guard non-divisible spatial dims (the strided VALID conv floors them).
    if H != nh * P or W != nw * P:
        pixel_values = pixel_values[:, :, :nh * P, :nw * P]

    # im2col: [B, C, nh, P, nw, P] -> [B, nh, nw, C, P, P] -> [M, K], cast to bf16.
    # One standalone XLA transpose+convert(+pad) fusion = one extra HBM pass
    # (see module-level TODO for the in-kernel relayout that would remove it).
    x = pixel_values.reshape(B, C, nh, P, nw, P)
    x = x.transpose(0, 2, 4, 1, 3, 5).reshape(M, K).astype(compute_dtype)

    # Weight flattened over (C, P, P) -> [K, hidden], matching the per-patch flatten order.
    w = weight.reshape(hidden, K).T.astype(compute_dtype)
    b = bias.astype(jnp.float32).reshape(1, hidden)

    # Alignment padding (exact-math zero padding, sliced off at the end):
    #   hidden -> multiple of 128 : lane-dense, unmasked output stores.
    #   K      -> multiple of 128 : aligned x lane dim / w sublane dim, no ragged MXU tail.
    #   M      -> multiple of tm  : tm itself a multiple of 16.
    hidden_pad = _round_up(hidden, 128)
    k_pad = _round_up(K, 128)
    tm = _choose_tile_m(M)
    m_pad = _round_up(M, tm)
    if hidden_pad != hidden or k_pad != K:
        w = jnp.pad(w, ((0, k_pad - K), (0, hidden_pad - hidden)))
        b = jnp.pad(b, ((0, 0), (0, hidden_pad - hidden)))
    if m_pad != M or k_pad != K:
        x = jnp.pad(x, ((0, m_pad - M), (0, k_pad - K)))

    compute_itemsize = jnp.dtype(compute_dtype).itemsize
    out_itemsize = jnp.dtype(out_dtype).itemsize

    # VMEM working set (x/out double-buffered over the M grid; w/bias budgeted
    # double-buffered too since they are not explicitly single-buffered yet).
    vmem_need = (2 * tm * k_pad * compute_itemsize
                 + 2 * k_pad * hidden_pad * compute_itemsize
                 + 2 * hidden_pad * 4
                 + 2 * tm * hidden_pad * out_itemsize)
    vmem_limit = int(min(96 * 1024 * 1024, max(32 * 1024 * 1024, 2 * vmem_need)))

    cost = pl.CostEstimate(
        flops=2 * m_pad * k_pad * hidden_pad,
        transcendentals=0,
        bytes_accessed=(m_pad * k_pad * compute_itemsize
                        + k_pad * hidden_pad * compute_itemsize
                        + hidden_pad * 4
                        + m_pad * hidden_pad * out_itemsize),
    )

    out = pl.pallas_call(
        _patch_embed_kernel,
        out_shape=jax.ShapeDtypeStruct((m_pad, hidden_pad), out_dtype),
        grid_spec=pltpu.PrefetchScalarGridSpec(
            num_scalar_prefetch=0,
            grid=(m_pad // tm,),
            in_specs=[
                pl.BlockSpec((tm, k_pad), lambda i: (i, 0)),          # x: tiled over M
                pl.BlockSpec((k_pad, hidden_pad), lambda i: (0, 0)),  # w: VMEM-resident
                pl.BlockSpec((1, hidden_pad), lambda i: (0, 0)),      # bias: VMEM-resident
            ],
            out_specs=pl.BlockSpec((tm, hidden_pad), lambda i: (i, 0)),
        ),
        compiler_params=pltpu.CompilerParams(
            # Independent M tiles: shards across TCs on dual-TC parts (v7x),
            # measured-neutral on single-TC v5e/v6e.
            dimension_semantics=("parallel",),
            vmem_limit_bytes=vmem_limit,
        ),
        cost_estimate=cost,
    )(x, w, b)

    return out[:M, :hidden].reshape(B, nh * nw, hidden)


class PatchEmbedingWrapperPallas:
    """Mirrors the PyTorch wrapper: holds the patch-embedding params, forwards pixel_values."""

    def __init__(self, weight, bias, patch_size, compute_dtype=jnp.bfloat16,
                 out_dtype=jnp.bfloat16):
        self.weight = weight
        self.bias = bias
        self.patch_size = patch_size
        self._fwd = jax.jit(functools.partial(
            patch_embedding_forward, patch_size=patch_size,
            compute_dtype=compute_dtype, out_dtype=out_dtype))

    def __call__(self, pixel_values, interpolate_pos_encoding=True):
        # interpolate_pos_encoding only skips a static size check in the original module.
        return self._fwd(pixel_values, self.weight, self.bias)


if __name__ == "__main__":
    # Small, deterministic shapes: B=2, C=4, H=W=16, patch=4, hidden=32.
    B, C, H, W = 2, 4, 16, 16
    P, hidden = 4, 32

    key = jax.random.PRNGKey(0)
    k_x, k_w, k_b = jax.random.split(key, 3)
    pixel_values = jax.random.normal(k_x, (B, C, H, W), dtype=jnp.float32)
    weight = jax.random.normal(k_w, (hidden, C, P, P), dtype=jnp.float32) * 0.02
    bias = jax.random.normal(k_b, (hidden,), dtype=jnp.float32) * 0.02

    module = PatchEmbedingWrapperPallas(weight, bias, patch_size=P)
    out = module(pixel_values, interpolate_pos_encoding=True)
    out = jax.block_until_ready(out)

    # Reference mirrors the kernel's precision path: bf16 inputs, f32 accumulation,
    # f32 bias add; strided conv (NCHW, OIHW) -> flatten(2) -> transpose(1, 2).
    ref = lax.conv_general_dilated(
        pixel_values.astype(jnp.bfloat16), weight.astype(jnp.bfloat16),
        window_strides=(P, P), padding="VALID",
        dimension_numbers=("NCHW", "OIHW", "NCHW"),
        preferred_element_type=jnp.float32,
    ) + bias.reshape(1, hidden, 1, 1)
    ref = ref.reshape(B, hidden, -1).transpose(0, 2, 1)   # f32 reference

    assert out.shape == (B, (H // P) * (W // P), hidden), out.shape
    assert out.dtype == jnp.bfloat16, out.dtype
    err = float(jnp.max(jnp.abs(out.astype(jnp.float32) - ref)))
    assert err < 2e-2, err   # bf16 output rounding + bf16 MXU path
    print("KERNEL_OK")
</pallas_src>

<mosaic_0001>
module attributes {stable_mosaic.version = 11 : i64} {
  func.func @_patch_embed_kernel(%arg0: i32, %arg1: memref<32x128xbf16, #tpu.memory_space<vmem>>, %arg2: memref<128x128xbf16, #tpu.memory_space<vmem>>, %arg3: memref<1x128xf32, #tpu.memory_space<vmem>>, %arg4: memref<32x128xbf16, #tpu.memory_space<vmem>>) attributes {dimension_semantics = [#tpu.dimension_semantics<parallel>], iteration_bounds = array<i64: 1>, scalar_prefetch = 0 : i64, scratch_operands = 0 : i64, tpu.core_type = #tpu.core_type<tc>, window_params = [{transform_indices = @transform_0, window_bounds = array<i64: 32, 128>}, {pipeline_mode = #tpu.pipeline_mode<synchronous>, transform_indices = @transform_1, window_bounds = array<i64: 128, 128>}, {pipeline_mode = #tpu.pipeline_mode<synchronous>, transform_indices = @transform_2, window_bounds = array<i64: 1, 128>}, {transform_indices = @transform_3, window_bounds = array<i64: 32, 128>}]} {
    %c0 = arith.constant 0 : index
    %c0_0 = arith.constant 0 : index
    %0 = vector.load %arg1[%c0, %c0_0] : memref<32x128xbf16, #tpu.memory_space<vmem>>, vector<32x128xbf16>
    %c0_1 = arith.constant 0 : index
    %c0_2 = arith.constant 0 : index
    %1 = vector.load %arg2[%c0_1, %c0_2] : memref<128x128xbf16, #tpu.memory_space<vmem>>, vector<128x128xbf16>
    %cst = arith.constant dense<0.000000e+00> : vector<32x128xf32>
    %2 = tpu.matmul %0, %1, %cst {dimension_numbers = #tpu.dot_dimension_numbers<[1], [0], [0], [1], [0, 0, 1, 1], [], []>} : vector<32x128xbf16>, vector<128x128xbf16>, vector<32x128xf32> -> vector<32x128xf32>
    %c0_3 = arith.constant 0 : index
    %c0_4 = arith.constant 0 : index
    %3 = vector.load %arg3[%c0_3, %c0_4] : memref<1x128xf32, #tpu.memory_space<vmem>>, vector<1x128xf32>
    %4 = vector.broadcast %3 : vector<1x128xf32> to vector<32x128xf32>
    %5 = arith.addf %2, %4 : vector<32x128xf32>
    %6 = arith.truncf %5 : vector<32x128xf32> to vector<32x128xbf16>
    %c0_5 = arith.constant 0 : index
    %c0_6 = arith.constant 0 : index
    %7 = vector.load %arg4[%c0_5, %c0_6] : memref<32x128xbf16, #tpu.memory_space<vmem>>, vector<32x128xbf16>
    tpu.vector_store %arg4[%c0_5, %c0_6], %6 {strides = array<i32>} : memref<32x128xbf16, #tpu.memory_space<vmem>>, vector<32x128xbf16>,
    return
  }
  func.func @transform_0(%arg0: i32) -> (i32, i32) {
    %c0_i32 = arith.constant 0 : i32
    %c0_i32_0 = arith.constant 0 : i32
    return %arg0, %c0_i32 : i32, i32
  }
  func.func @transform_1(%arg0: i32) -> (i32, i32) {
    %c0_i32 = arith.constant 0 : i32
    %c0_i32_0 = arith.constant 0 : i32
    %c0_i32_1 = arith.constant 0 : i32
    return %c0_i32, %c0_i32_0 : i32, i32
  }
  func.func @transform_2(%arg0: i32) -> (i32, i32) {
    %c0_i32 = arith.constant 0 : i32
    %c0_i32_0 = arith.constant 0 : i32
    %c0_i32_1 = arith.constant 0 : i32
    return %c0_i32, %c0_i32_0 : i32, i32
  }
  func.func @transform_3(%arg0: i32) -> (i32, i32) {
    %c0_i32 = arith.constant 0 : i32
    %c0_i32_0 = arith.constant 0 : i32
    return %arg0, %c0_i32 : i32, i32
  }
}

</mosaic_0001>

<llo_original>
// kernel: patch_embedding_forward.1
$region0: #{patch_embedding_forward.1}
  #allocation0 [shape = 'u32[]', space=smem, size = 0x4, offset = 0x4, fixed_abs, tag = 'smem constant byte address 0x4 - core index']
  #allocation1 [shape = 'u32[144,128]{1,0:T(1,128)}', space=vmem, size = 0x12000, scoped, tag = 'internal scratch']
  %s0 = inlined_call_operand.vmem [shape: bf16[32,128], index: 0, kind: input, shape index: {}]
  %s1 = inlined_call_operand.vmem [shape: bf16[128,128], index: 1, kind: input, shape index: {}]
  %s2 = inlined_call_operand.vmem [shape: f32[1,128], index: 2, kind: input, shape index: {}]
  %s3 = inlined_call_operand.hbm [shape: bf16[32,128], index: 3, kind: output, shape index: {}]
  %s4 = sld [smem:[#allocation0]]
  $region22: #{patch_embedding_forward.1} parent=0
    _
  %s6 = ssub.s32 1, %s4
  %s7 = scalar_select 0, %s6, %s4
  $region1: #{patch_embedding_forward.1} parent=0
    #allocation2 [shape = 'u8[8192]{0}', space=vmem, size = 0x2000, scoped, tag = 'output window, operand 0, single buffered']
    #allocation3 [shape = 's32[1]{0}', space=sflag, size = 0x4, scoped, tag = 'scoped memory for patch_embedding_forward.1']
    %8 = vsyncpa [#allocation3], 0
    // Predicated region
    $region2: #{patch_embedding_forward.1} parent=1 // pred_check
      _
    $region3: #{patch_embedding_forward.1} parent=1 // pred_check_branch
      %10 = sbr.rel (0) target = $region5
    $region4: #{patch_embedding_forward.1} parent=1 // pred_region
      _
    $region5: #{patch_embedding_forward.1} parent=1 // pred_fallthru
      _
    // Predicated region
    $region6: #{patch_embedding_forward.1} parent=1 // pred_check
      _
    $region7: #{patch_embedding_forward.1} parent=1 // pred_check_branch
      %12 = sbr.rel (0) target = $region9
    $region8: #{patch_embedding_forward.1} parent=1 // pred_region
      _
    $region9: #{patch_embedding_forward.1} parent=1 // pred_fallthru
      _
    // Predicated region
    $region10: #{patch_embedding_forward.1} parent=1 // pred_check
      _
    $region11: #{patch_embedding_forward.1} parent=1 // pred_check_branch
      %14 = sbr.rel (0) target = $region13
    $region12: #{patch_embedding_forward.1} parent=1 // pred_region
      _
    $region13: #{patch_embedding_forward.1} parent=1 // pred_fallthru
      _
    %v16 = vld [vmem:[%s0] sm:$0xf]
    %v17 = vld [vmem:[%s0 + $0x4] sm:$0xf]
    %v18 = vld [vmem:[%s0 + $0x8] sm:$0xf]
    %v19 = vld [vmem:[%s0 + $0xc] sm:$0xf]
    %v20 = vld [vmem:[%s1] sm:$0xf]
    %v21 = vld [vmem:[%s1 + $0x4] sm:$0xf]
    %v22 = vld [vmem:[%s1 + $0x8] sm:$0xf]
    %v23 = vld [vmem:[%s1 + $0xc] sm:$0xf]
    %v24 = vld [vmem:[%s1 + $0x10] sm:$0xf]
    %v25 = vld [vmem:[%s1 + $0x14] sm:$0xf]
    %v26 = vld [vmem:[%s1 + $0x18] sm:$0xf]
    %v27 = vld [vmem:[%s1 + $0x1c] sm:$0xf]
    %v28 = vld [vmem:[%s1 + $0x20] sm:$0xf]
    %v29 = vld [vmem:[%s1 + $0x24] sm:$0xf]
    %v30 = vld [vmem:[%s1 + $0x28] sm:$0xf]
    %v31 = vld [vmem:[%s1 + $0x2c] sm:$0xf]
    %v32 = vld [vmem:[%s1 + $0x30] sm:$0xf]
    %v33 = vld [vmem:[%s1 + $0x34] sm:$0xf]
    %v34 = vld [vmem:[%s1 + $0x38] sm:$0xf]
    %v35 = vld [vmem:[%s1 + $0x3c] sm:$0xf]
    %v36 = vld [vmem:[%s2] sm:$0x1]
    %v38 = vlaneseq
    %v39 = vshrl.u32 %v38, 7
    %v40 = vsub.s32 0, %v39
    %v41 = vrot.slane %v36, %v40
    %v47 = vunpack.c.l.b16 %v16
    %v48 = vunpack.c.l.b16 %v17
    %v49 = vunpack.c.l.b16 %v18
    %v50 = vunpack.c.l.b16 %v19
    %v51 = vpack.c.b16 %v48, %v47
    %v52 = vpack.c.b16 %v50, %v49
    %v71 = vunpack.c.l.b16 %v20
    %v72 = vunpack.c.l.b16 %v21
    %v73 = vunpack.c.l.b16 %v22
    %v74 = vunpack.c.l.b16 %v23
    %v75 = vunpack.c.l.b16 %v24
    %v76 = vunpack.c.l.b16 %v25
    %v77 = vunpack.c.l.b16 %v26
    %v78 = vunpack.c.l.b16 %v27
    %v79 = vunpack.c.l.b16 %v28
    %v80 = vunpack.c.l.b16 %v29
    %v81 = vunpack.c.l.b16 %v30
    %v82 = vunpack.c.l.b16 %v31
    %v83 = vunpack.c.l.b16 %v32
    %v84 = vunpack.c.l.b16 %v33
    %v85 = vunpack.c.l.b16 %v34
    %v86 = vunpack.c.l.b16 %v35
    %v87 = vpack.c.b16 %v72, %v71
    %v88 = vpack.c.b16 %v74, %v73
    %v89 = vpack.c.b16 %v76, %v75
    %v90 = vpack.c.b16 %v78, %v77
    %v91 = vpack.c.b16 %v80, %v79
    %v92 = vpack.c.b16 %v82, %v81
    %v93 = vpack.c.b16 %v84, %v83
    %v94 = vpack.c.b16 %v86, %v85
    %103 = vmatprep.subr.bf16.mxu0 0
    %104 = vmatpush1.bf16.msra.mxu0 %v94
    %105 = vmatprep.subr.bf16.mxu0 0
    %106 = vmatpush1.bf16.msra.mxu0 %v93
    %107 = vmatprep.subr.bf16.mxu0 0
    %108 = vmatpush1.bf16.msra.mxu0 %v92
    %109 = vmatprep.subr.bf16.mxu0 0
    %110 = vmatpush1.bf16.msra.mxu0 %v91
    %111 = vmatprep.subr.bf16.mxu0 0
    %112 = vmatpush1.bf16.msra.mxu0 %v90
    %113 = vmatprep.subr.bf16.mxu0 0
    %114 = vmatpush1.bf16.msra.mxu0 %v89
    %115 = vmatprep.subr.bf16.mxu0 0
    %116 = vmatpush1.bf16.msra.mxu0 %v88
    %117 = vmatprep.subr.bf16.mxu0 0
    %118 = vmatpush1.bf16.msra.mxu0 %v87
    %119 = vmatprep.subr.bf16.mxu0 0
    %120 = vmatpush2.bf16.msra.mxu0 0
    %121 = vmatprep.subr.bf16.mxu0 0
    %122 = vmatpush2.bf16.msra.mxu0 0
    %123 = vmatprep.subr.bf16.mxu0 0
    %124 = vmatpush2.bf16.msra.mxu0 0
    %125 = vmatprep.subr.bf16.mxu0 0
    %126 = vmatpush2.bf16.msra.mxu0 0
    %127 = vmatprep.subr.bf16.mxu0 0
    %128 = vmatpush2.bf16.msra.mxu0 0
    %129 = vmatprep.subr.bf16.mxu0 0
    %130 = vmatpush2.bf16.msra.mxu0 0
    %131 = vmatprep.subr.bf16.mxu0 0
    %132 = vmatpush2.bf16.msra.mxu0 0
    %133 = vmatprep.subr.bf16.mxu0 0
    %134 = vmatpush2.bf16.msra.mxu0 0
    %135 = vmatprep.mubr.bf16.mxu0 0
    %136 = vmatmul.mubr.bf16.gmra.mxu0 %v51
    %v137 = vpop.f32.mrf.mxu0
    %v138 = vadd.f32 %v41, %v137
    %v139 = vpop.f32.mrf.mxu0
    %v140 = vpop.f32.mrf.mxu0
    %v141 = vadd.f32 %v41, %v140
    %v142 = vpop.f32.mrf.mxu0
    %143 = vmatprep.mubr.bf16.mxu0 0
    %144 = vmatmul.mubr.bf16.gmra.mxu0 %v52
    %v145 = vpop.f32.mrf.mxu0
    %v146 = vadd.f32 %v41, %v145
    %v147 = vpop.f32.mrf.mxu0
    %v148 = vpop.f32.mrf.mxu0
    %v149 = vadd.f32 %v41, %v148
    %v150 = vpop.f32.mrf.mxu0
    %151 = vdwg.mxu0
    %v152 = vpack.c.bf16 %v141, %v138
    %v153 = vpack.c.bf16 %v149, %v146
    %v156 = vunpack.c.l.b16 %v152
    %v157 = vunpack.c.h.b16 %v152
    %v158 = vunpack.c.l.b16 %v153
    %v159 = vunpack.c.h.b16 %v153
    %v160 = vpack.c.b16 %v156, %v156
    %v161 = vpack.c.b16 %v157, %v157
    %v162 = vpack.c.b16 %v158, %v158
    %v163 = vpack.c.b16 %v159, %v159
    %168 = vst [vmem:[#allocation2] sm:$0xf] %v160
    %169 = vst [vmem:[#allocation2 + $0x4] sm:$0xf] %v161
    %170 = vst [vmem:[#allocation2 + $0x8] sm:$0xf] %v162
    %171 = vst [vmem:[#allocation2 + $0xc] sm:$0xf] %v163
    // Predicated region
    $region14: #{patch_embedding_forward.1} parent=1 // pred_check
      _
    $region15: #{patch_embedding_forward.1} parent=1 // pred_check_branch
      %173 = sbr.rel (0) target = $region17
    $region16: #{patch_embedding_forward.1} parent=1 // pred_region
      %s175 = ssub.s32 256, 256
      %176 = vsyncadd [#allocation3], %s175
      %s177 = sshll.u32 [#allocation2], 4
      %s178 = int_to_ptr.vmem [resolvable:$true] %s177
      %183 = dma.vmem_to_hbm [thread:$0]  %s178, 256, %s3, [#allocation3], 64, 64, 4
    $region17: #{patch_embedding_forward.1} parent=1 // pred_fallthru
      _
    // Predicated region
    $region18: #{patch_embedding_forward.1} parent=1 // pred_check
      _
    $region19: #{patch_embedding_forward.1} parent=1 // pred_check_branch
      %185 = sbr.rel (0) target = $region21
    $region20: #{patch_embedding_forward.1} parent=1 // pred_region
      %186 = dma.done [#allocation3], 256
    $region21: #{patch_embedding_forward.1} parent=1 // pred_fallthru
      _
    %187 = vsyncpa [#allocation3], 1

</llo_original>
